<compile_context>
chip_gen: v6e
topology: v6e:2x2x1
jax: 0.10.0
libtpu: 0.0.40
codegen_flags: <defaults>
</compile_context>

<pallas_src>
import functools

import jax
import jax.numpy as jnp
from jax.experimental import pallas as pl
from jax.experimental.pallas import tpu as pltpu

EPS = 1e-9


def _windowed_norm_kernel(x_ref, m_ref, band_ref, o_ref, *, batch_tile,
                          channel_sum, eps):
    """Processes `batch_tile` independent batch rows per grid step.

    x_ref:    (Bt, C, Lp) f32
    m_ref:    (Bt, 1, Lp) f32
    band_ref: (Lp, Lp)    f32  (0/1 band matrix; resident across the whole grid)
    o_ref:    (Bt, C, Lp) f32
    """
    band = band_ref[...]

    def wsum(v):
        # Zero-padded moving sum along lanes as one MXU matmul: (R,Lp)@(Lp,Lp).
        return jnp.dot(v, band, preferred_element_type=jnp.float32)

    for b in range(batch_tile):       # static unroll; rows are independent
        x = x_ref[b]                  # (C, Lp)
        m = m_ref[b]                  # (1, Lp)

        # Window count of valid positions; reciprocal on the EUP (free slot).
        inv_den = pl.reciprocal(wsum(m) + eps, approx=True)          # (1, Lp)

        xs = jnp.sum(x, axis=0, keepdims=True) if channel_sum else x
        mean = wsum(xs) * inv_den * m                                # (1|C, Lp)

        term = jnp.square(x - mean) * m                              # (C, Lp)
        ts = jnp.sum(term, axis=0, keepdims=True) if channel_sum else term
        var = wsum(ts) * inv_den * m                                 # (1|C, Lp)

        # rsqrt on the EUP instead of VPU divide + sqrt.
        o_ref[b] = ((x - mean) * jax.lax.rsqrt(var + eps)).astype(o_ref.dtype)


def _pick_batch_tile(B, C, L_pad):
    """Largest divisor of B whose block stays well inside VMEM and, when B >= 2,
    leaves >= 2 grid steps (keeps both v7x TensorCores busy)."""
    per_batch_bytes = 8 * C * L_pad * 4          # in/out double-buffers + live intermediates
    budget = 4 << 20                             # modest: fits default scoped VMEM everywhere
    max_bt = max(1, budget // max(per_batch_bytes, 1))
    best = 1
    for d in range(1, B + 1):
        if B % d != 0 or d > max_bt:
            continue
        if B >= 2 and (B // d) < 2:
            continue
        best = d
    return best


def windowed_norm_1d(x, mask, *, norm_type, window_length, eps=EPS,
                     batch_tile=None):
    """x: (B, C, L), mask: (B, 1, L) -> (B, C, L)."""
    B, C, L = x.shape
    assert mask.shape == (B, 1, L)
    assert window_length % 2 == 1, "odd window_length keeps output length == L"
    channel_sum = norm_type != "instance"

    out_dtype = x.dtype
    x = x.astype(jnp.float32)
    mask = mask.astype(jnp.float32)

    # Lane-dense layout: pad L up to a multiple of 128.  Zero-padded x/mask
    # contribute nothing to either windowed sum, so semantics are preserved.
    L_pad = max(128, ((L + 127) // 128) * 128)
    if L_pad != L:
        x = jnp.pad(x, ((0, 0), (0, 0), (0, L_pad - L)))
        mask = jnp.pad(mask, ((0, 0), (0, 0), (0, L_pad - L)))

    # 0/1 band matrix realizing the zero-padded moving sum as a matmul.
    half = window_length // 2
    idx = jnp.arange(L_pad, dtype=jnp.int32)
    band = (jnp.abs(idx[:, None] - idx[None, :]) <= half).astype(jnp.float32)

    bt = batch_tile if batch_tile is not None else _pick_batch_tile(B, C, L_pad)
    assert B % bt == 0

    kernel = functools.partial(_windowed_norm_kernel, batch_tile=bt,
                               channel_sum=channel_sum, eps=eps)

    out = pl.pallas_call(
        kernel,
        out_shape=jax.ShapeDtypeStruct((B, C, L_pad), jnp.float32),
        grid=(B // bt,),
        in_specs=[
            pl.BlockSpec((bt, C, L_pad), lambda i: (i, 0, 0)),
            pl.BlockSpec((bt, 1, L_pad), lambda i: (i, 0, 0)),
            # Constant block index -> band stays resident, DMA'd once.
            pl.BlockSpec((L_pad, L_pad), lambda i: (0, 0)),
        ],
        out_specs=pl.BlockSpec((bt, C, L_pad), lambda i: (i, 0, 0)),
        compiler_params=pltpu.CompilerParams(
            dimension_semantics=("parallel",),
            vmem_limit_bytes=64 * 1024 * 1024,
        ),
    )(x, mask, band)

    return out[:, :, :L].astype(out_dtype)


# ---------------- pure-JAX reference (mirrors the PyTorch code) ----------------
def _ref_wsum(v, W):
    pad = W // 2
    L = v.shape[-1]
    vp = jnp.pad(v, ((0, 0), (0, 0), (pad, pad)))
    return sum(vp[..., k:k + L] for k in range(W))


def _ref_forward(x, mask, norm_type, W, eps=EPS):
    def pool_forward(v):
        s = _ref_wsum(v, W)
        if norm_type != "instance":
            s = jnp.sum(s, axis=1, keepdims=True)
        return s

    def pool_mean(v):
        return pool_forward(v) / (pool_forward(mask) + eps) * mask

    mean = pool_mean(x)
    var = pool_mean(jnp.square(x - mean) * mask)
    return (x - mean) / jnp.sqrt(var + eps)


if __name__ == "__main__":
    B, C, L = 2, 4, 16

    key = jax.random.PRNGKey(0)
    x = jax.random.normal(key, (B, C, L), dtype=jnp.float32)

    lens = jnp.array([12, 10])
    pos = jnp.arange(L)[None, None, :]
    mask = (pos < lens[:, None, None]).astype(jnp.float32)  # (B, 1, L)

    # W=17 > L exercises the "window wider than the sequence" edge case.
    for norm_type in ("instance", "layer"):
        for W in (5, 17):
            out = windowed_norm_1d(x, mask, norm_type=norm_type, window_length=W)
            out = jax.block_until_ready(out)
            ref = _ref_forward(x, mask, norm_type, W)
            assert out.shape == (B, C, L)
            # 2e-3 tolerance: approx EUP reciprocal of the window count is the
            # dominant (tiny) error source.
            assert jnp.allclose(out, ref, rtol=2e-3, atol=2e-3), (
                f"mismatch for norm_type={norm_type}, W={W}")

    print("KERNEL_OK")
</pallas_src>

<mosaic_0001>
module attributes {stable_mosaic.version = 11 : i64} {
  func.func @_windowed_norm_kernel(%arg0: i32, %arg1: memref<1x4x128xf32, #tpu.memory_space<vmem>>, %arg2: memref<1x1x128xf32, #tpu.memory_space<vmem>>, %arg3: memref<128x128xf32, #tpu.memory_space<vmem>>, %arg4: memref<1x4x128xf32, #tpu.memory_space<vmem>>) attributes {dimension_semantics = [#tpu.dimension_semantics<parallel>], iteration_bounds = array<i64: 2>, scalar_prefetch = 0 : i64, scratch_operands = 0 : i64, tpu.core_type = #tpu.core_type<tc>, window_params = [{transform_indices = @transform_0, window_bounds = array<i64: 1, 4, 128>}, {transform_indices = @transform_1, window_bounds = array<i64: 1, 1, 128>}, {pipeline_mode = #tpu.pipeline_mode<synchronous>, transform_indices = @transform_2, window_bounds = array<i64: 128, 128>}, {transform_indices = @transform_3, window_bounds = array<i64: 1, 4, 128>}]} {
    %c0 = arith.constant 0 : index
    %c0_0 = arith.constant 0 : index
    %0 = vector.load %arg3[%c0, %c0_0] : memref<128x128xf32, #tpu.memory_space<vmem>>, vector<128x128xf32>
    %c0_1 = arith.constant 0 : index
    %c0_2 = arith.constant 0 : index
    %c0_3 = arith.constant 0 : index
    %1 = vector.load %arg1[%c0_1, %c0_2, %c0_3] : memref<1x4x128xf32, #tpu.memory_space<vmem>>, vector<1x4x128xf32>
    %2 = vector.shape_cast %1 : vector<1x4x128xf32> to vector<4x128xf32>
    %c0_4 = arith.constant 0 : index
    %c0_5 = arith.constant 0 : index
    %c0_6 = arith.constant 0 : index
    %3 = vector.load %arg2[%c0_4, %c0_5, %c0_6] : memref<1x1x128xf32, #tpu.memory_space<vmem>>, vector<1x1x128xf32>
    %4 = vector.shape_cast %3 : vector<1x1x128xf32> to vector<1x128xf32>
    %cst = arith.constant dense<0.000000e+00> : vector<1x128xf32>
    %5 = tpu.matmul %4, %0, %cst {dimension_numbers = #tpu.dot_dimension_numbers<[1], [0], [0], [1], [0, 0, 1, 1], [], []>} : vector<1x128xf32>, vector<128x128xf32>, vector<1x128xf32> -> vector<1x128xf32>
    %cst_7 = arith.constant 9.99999971E-10 : f32
    %6 = vector.broadcast %cst_7 : f32 to vector<1x128xf32>
    %7 = arith.addf %5, %6 : vector<1x128xf32>
    %8 = tpu.reciprocal %7 {approx = true} : vector<1x128xf32> -> vector<1x128xf32>
    %cst_8 = arith.constant dense<0.000000e+00> : vector<4x128xf32>
    %9 = tpu.matmul %2, %0, %cst_8 {dimension_numbers = #tpu.dot_dimension_numbers<[1], [0], [0], [1], [0, 0, 1, 1], [], []>} : vector<4x128xf32>, vector<128x128xf32>, vector<4x128xf32> -> vector<4x128xf32>
    %10 = vector.broadcast %8 : vector<1x128xf32> to vector<4x128xf32>
    %11 = arith.mulf %9, %10 : vector<4x128xf32>
    %12 = vector.broadcast %4 : vector<1x128xf32> to vector<4x128xf32>
    %13 = arith.mulf %11, %12 : vector<4x128xf32>
    %14 = arith.subf %2, %13 : vector<4x128xf32>
    %15 = arith.mulf %14, %14 : vector<4x128xf32>
    %16 = vector.broadcast %4 : vector<1x128xf32> to vector<4x128xf32>
    %17 = arith.mulf %15, %16 : vector<4x128xf32>
    %cst_9 = arith.constant dense<0.000000e+00> : vector<4x128xf32>
    %18 = tpu.matmul %17, %0, %cst_9 {dimension_numbers = #tpu.dot_dimension_numbers<[1], [0], [0], [1], [0, 0, 1, 1], [], []>} : vector<4x128xf32>, vector<128x128xf32>, vector<4x128xf32> -> vector<4x128xf32>
    %19 = vector.broadcast %8 : vector<1x128xf32> to vector<4x128xf32>
    %20 = arith.mulf %18, %19 : vector<4x128xf32>
    %21 = vector.broadcast %4 : vector<1x128xf32> to vector<4x128xf32>
    %22 = arith.mulf %20, %21 : vector<4x128xf32>
    %23 = arith.subf %2, %13 : vector<4x128xf32>
    %cst_10 = arith.constant 9.99999971E-10 : f32
    %24 = vector.broadcast %cst_10 : f32 to vector<4x128xf32>
    %25 = arith.addf %22, %24 : vector<4x128xf32>
    %26 = math.rsqrt %25 : vector<4x128xf32>
    %27 = arith.mulf %23, %26 : vector<4x128xf32>
    %c0_11 = arith.constant 0 : index
    %c0_12 = arith.constant 0 : index
    %c0_13 = arith.constant 0 : index
    %28 = vector.load %arg4[%c0_11, %c0_12, %c0_13] : memref<1x4x128xf32, #tpu.memory_space<vmem>>, vector<1x4x128xf32>
    %29 = vector.shape_cast %28 : vector<1x4x128xf32> to vector<4x128xf32>
    %30 = vector.shape_cast %27 : vector<4x128xf32> to vector<1x4x128xf32>
    tpu.vector_store %arg4[%c0_11, %c0_12, %c0_13], %30 {strides = array<i32>} : memref<1x4x128xf32, #tpu.memory_space<vmem>>, vector<1x4x128xf32>,
    return
  }
  func.func @transform_0(%arg0: i32) -> (i32, i32, i32) {
    %c0_i32 = arith.constant 0 : i32
    %c0_i32_0 = arith.constant 0 : i32
    %c0_i32_1 = arith.constant 0 : i32
    return %arg0, %c0_i32, %c0_i32_0 : i32, i32, i32
  }
  func.func @transform_1(%arg0: i32) -> (i32, i32, i32) {
    %c0_i32 = arith.constant 0 : i32
    %c0_i32_0 = arith.constant 0 : i32
    %c0_i32_1 = arith.constant 0 : i32
    return %arg0, %c0_i32, %c0_i32_0 : i32, i32, i32
  }
  func.func @transform_2(%arg0: i32) -> (i32, i32) {
    %c0_i32 = arith.constant 0 : i32
    %c0_i32_0 = arith.constant 0 : i32
    %c0_i32_1 = arith.constant 0 : i32
    return %c0_i32, %c0_i32_0 : i32, i32
  }
  func.func @transform_3(%arg0: i32) -> (i32, i32, i32) {
    %c0_i32 = arith.constant 0 : i32
    %c0_i32_0 = arith.constant 0 : i32
    %c0_i32_1 = arith.constant 0 : i32
    return %arg0, %c0_i32, %c0_i32_0 : i32, i32, i32
  }
}

</mosaic_0001>

<llo_original>
// kernel: tpu_custom_call.1
$region0: #{tpu_custom_call.1}
  #allocation0 [shape = 'u32[]', space=smem, size = 0x4, offset = 0x4, fixed_abs, tag = 'smem constant byte address 0x4 - core index']
  #allocation1 [shape = 'u32[144,128]{1,0:T(1,128)}', space=vmem, size = 0x12000, scoped, tag = 'internal scratch']
  %s0 = inlined_call_operand.hbm [shape: f32[2,4,128], index: 0, kind: input, shape index: {}]
  %s1 = inlined_call_operand.hbm [shape: f32[2,1,128], index: 1, kind: input, shape index: {}]
  %s2 = inlined_call_operand.hbm [shape: f32[128,128], index: 2, kind: input, shape index: {}]
  %s3 = inlined_call_operand.hbm [shape: f32[2,4,128], index: 3, kind: output, shape index: {}]
  %s4 = sld [smem:[#allocation0]]
  $region57: #{tpu_custom_call.1} parent=0
    _
  %s6 = ssub.s32 1, %s4
  %s7 = scalar_select 0, %s6, %s4
  $region1: #{tpu_custom_call.1} parent=0
    #allocation2 [shape = 'u8[4096]{0}', space=vmem, size = 0x1000, scoped, tag = 'input window, operand 0']
    #allocation3 [shape = 's32[2]{0}', space=sflag, size = 0x8, scoped, tag = 'scoped memory for tpu_custom_call.1']
    #allocation4 [shape = 's32[2]{0}', space=sflag, size = 0x8, scoped, tag = 'scoped memory for tpu_custom_call.1']
    #allocation5 [shape = 'u8[1024]{0}', space=vmem, size = 0x400, scoped, tag = 'input window, operand 1']
    #allocation6 [shape = 's32[2]{0}', space=sflag, size = 0x8, scoped, tag = 'scoped memory for tpu_custom_call.1']
    #allocation7 [shape = 'u8[65536]{0}', space=vmem, size = 0x10000, scoped, tag = 'input window, operand 2, single buffered']
    #allocation8 [shape = 'u8[4096]{0}', space=vmem, size = 0x1000, scoped, tag = 'output window, operand 0']
    %8 = vsyncpa [#allocation3], 0
    %s9 = scalar_lea.sflag [#allocation3], 1
    %10 = vsyncpa %s9, 0
    %11 = vsyncpa [#allocation6], 0
    %s12 = scalar_lea.sflag [#allocation6], 1
    %13 = vsyncpa %s12, 0
    %14 = vsyncpa [#allocation4], 0
    %s15 = scalar_lea.sflag [#allocation4], 1
    %16 = vsyncpa %s15, 0
    loop: start=0, step=1, limit=4
    $region2: #{tpu_custom_call.1} parent=1 // loop_pre_header
      _
    $region3: #{tpu_custom_call.1} parent=1 // loop_header
      %s18 = sphi 0, %s22
      %p19 = scmp.ge.s32.totalorder %s18, 4
      %s28 = sphi 0, %s30
      %s31 = sphi 0, %s28
      %s32 = sphi 0, %s31
      %s48 = sphi 0, %s32
      %s54 = sphi 0, %s56
      %s57 = sphi 0, %s54
      %s58 = sphi 0, %s57
      %s74 = sphi 0, %s58
      %s78 = sphi 0, %s78
      %s80 = sphi 0, %s78
      %s81 = sphi 0, %s80
      %s95 = sphi 0, %s81
      %s101 = sphi 0, %s103
      %s104 = sphi 0, %s101
      %s105 = sphi 0, %s104
      %s121 = sphi 0, %s105
    $region4: #{tpu_custom_call.1} parent=1 // loop_header_branch
      %21 = sbr.rel (%p19) target = $region8
    $region5: #{tpu_custom_call.1} parent=1 // loop_body
      %s23 = ssub.s32 %s18, 1
      %s24 = ssub.s32 %s18, 2
      %s25 = sadd.s32 %s18, 1
      %s26 = ssub.s32 %s18, %s25
      %p27 = scmp.eq.s32.totalorder %s26, 0
      %s29 = sadd.s32 %s28, 1
      %s30 = scalar_select %p27, %s28, %s29
      %p33 = pneg %p27
      %p34 = scmp.eq.s32.totalorder %s18, 1
      %p35 = por %p33, %p34
      %p36 = scmp.ne.s32.totalorder %s28, %s31
      %p37 = scmp.eq.s32.totalorder %s18, 0
      %p38 = por %p36, %p37
      %p39 = scmp.ne.s32.totalorder %s28, %s31
      %p40 = scmp.eq.s32.totalorder %s23, 1
      %p41 = por %p39, %p40
      %p42 = scmp.ne.s32.totalorder %s31, %s32
      %p43 = scmp.eq.s32.totalorder %s23, 0
      %p44 = por %p42, %p43
      %p45 = scmp.ne.s32.totalorder %s31, %s32
      %p46 = scmp.eq.s32.totalorder %s24, 1
      %p47 = por %p45, %p46
      %p49 = scmp.ne.s32.totalorder %s32, %s48
      %p50 = scmp.eq.s32.totalorder %s24, 0
      %p51 = por %p49, %p50
      %s52 = ssub.s32 %s18, %s25
      %p53 = scmp.eq.s32.totalorder %s52, 0
      %s55 = sadd.s32 %s54, 1
      %s56 = scalar_select %p53, %s54, %s55
      %p59 = pneg %p53
      %p60 = scmp.eq.s32.totalorder %s18, 1
      %p61 = por %p59, %p60
      %p62 = scmp.ne.s32.totalorder %s54, %s57
      %p63 = scmp.eq.s32.totalorder %s18, 0
      %p64 = por %p62, %p63
      %p65 = scmp.ne.s32.totalorder %s54, %s57
      %p66 = scmp.eq.s32.totalorder %s23, 1
      %p67 = por %p65, %p66
      %p68 = scmp.ne.s32.totalorder %s57, %s58
      %p69 = scmp.eq.s32.totalorder %s23, 0
      %p70 = por %p68, %p69
      %p71 = scmp.ne.s32.totalorder %s57, %s58
      %p72 = scmp.eq.s32.totalorder %s24, 1
      %p73 = por %p71, %p72
      %p75 = scmp.ne.s32.totalorder %s58, %s74
      %p76 = scmp.eq.s32.totalorder %s24, 0
      %p77 = por %p75, %p76
      %s79 = sadd.s32 %s78, 1
      %p82 = scmp.eq.s32.totalorder %s18, 1
      %p83 = scmp.ne.s32.totalorder %s78, %s80
      %p84 = scmp.eq.s32.totalorder %s18, 0
      %p85 = por %p83, %p84
      %p86 = scmp.ne.s32.totalorder %s78, %s80
      %p87 = scmp.eq.s32.totalorder %s23, 1
      %p88 = por %p86, %p87
      %p89 = scmp.ne.s32.totalorder %s80, %s81
      %p90 = scmp.eq.s32.totalorder %s23, 0
      %p91 = por %p89, %p90
      %p92 = scmp.ne.s32.totalorder %s80, %s81
      %p93 = scmp.eq.s32.totalorder %s24, 1
      %p94 = por %p92, %p93
      %p96 = scmp.ne.s32.totalorder %s81, %s95
      %p97 = scmp.eq.s32.totalorder %s24, 0
      %p98 = por %p96, %p97
      %s99 = ssub.s32 %s18, %s25
      %p100 = scmp.eq.s32.totalorder %s99, 0
      %s102 = sadd.s32 %s101, 1
      %s103 = scalar_select %p100, %s101, %s102
      %p106 = pneg %p100
      %p107 = scmp.eq.s32.totalorder %s18, 1
      %p108 = por %p106, %p107
      %p109 = scmp.ne.s32.totalorder %s101, %s104
      %p110 = scmp.eq.s32.totalorder %s18, 0
      %p111 = por %p109, %p110
      %p112 = scmp.ne.s32.totalorder %s101, %s104
      %p113 = scmp.eq.s32.totalorder %s23, 1
      %p114 = por %p112, %p113
      %p115 = scmp.ne.s32.totalorder %s104, %s105
      %p116 = scmp.eq.s32.totalorder %s23, 0
      %p117 = por %p115, %p116
      %p118 = scmp.ne.s32.totalorder %s104, %s105
      %p119 = scmp.eq.s32.totalorder %s24, 1
      %p120 = por %p118, %p119
      %p122 = scmp.ne.s32.totalorder %s105, %s121
      %p123 = scmp.eq.s32.totalorder %s24, 0
      %p124 = por %p122, %p123
      %p125 = scmp.le.s32.totalorder 1, %s18
      %p126 = scmp.lt.s32.totalorder %s18, 3
      %p127 = pnand %p125, %p126
      %p128 = pneg %p127
      // Predicated region
      $region9: #{tpu_custom_call.1} parent=5 // pred_check
        _
      $region10: #{tpu_custom_call.1} parent=5 // pred_check_branch
        %130 = sbr.rel (%p127) target = $region12
      $region11: #{tpu_custom_call.1} parent=5 // pred_region
        %s131 = ssub.s32 %s18, 1
        // Predicated region
        $region13: #{tpu_custom_call.1} parent=11 // pred_check
          %p132 = pneg %p91
        $region14: #{tpu_custom_call.1} parent=11 // pred_check_branch
          %134 = sbr.rel (%p132) target = $region16
        $region15: #{tpu_custom_call.1} parent=11 // pred_region
          %s136 = ssub.s32 2048, 2048
          %137 = vsyncadd [#allocation6], %s136
          %s138 = sshll.u32 [#allocation7], 4
          %s139 = int_to_ptr.vmem [resolvable:$true] %s138
          %144 = dma.hbm_to_vmem [thread:$0]  %s2, 2048, %s139, [#allocation6], 128, 128, 8
        $region16: #{tpu_custom_call.1} parent=11 // pred_fallthru
          _
      $region12: #{tpu_custom_call.1} parent=5 // pred_fallthru
        _
      %p145 = scmp.lt.s32.totalorder %s18, 2
      // Predicated region
      $region17: #{tpu_custom_call.1} parent=5 // pred_check
        %p146 = pneg %p145
      $region18: #{tpu_custom_call.1} parent=5 // pred_check_branch
        %148 = sbr.rel (%p146) target = $region20
      $region19: #{tpu_custom_call.1} parent=5 // pred_region
        // Predicated region
        $region21: #{tpu_custom_call.1} parent=19 // pred_check
          %p149 = pneg %p38
        $region22: #{tpu_custom_call.1} parent=19 // pred_check_branch
          %151 = sbr.rel (%p149) target = $region24
        $region23: #{tpu_custom_call.1} parent=19 // pred_region
          %s152 = sand.u32 %s28, 1
          %s153 = scalar_lea.sflag [#allocation3], %s152
          %s154 = sand.u32 %s28, 1
          %s155 = smul.addr %s154, 4
          %s156 = scalar_lea.vmem [#allocation2], %s155
          %s158 = ssub.s32 64, 64
          %159 = vsyncadd %s153, %s158
          %s160 = smul.addr %s18, 64
          %s161 = scalar_lea.hbm %s0, %s160
          %s163 = sshll.u32 %s156, 4
          %s164 = int_to_ptr.vmem [resolvable:$true] %s163
          %166 = dma.hbm_to_vmem [thread:$0]  %s161, 64, %s164, %s153
        $region24: #{tpu_custom_call.1} parent=19 // pred_fallthru
          _
        // Predicated region
        $region25: #{tpu_custom_call.1} parent=19 // pred_check
          %p167 = pneg %p64
        $region26: #{tpu_custom_call.1} parent=19 // pred_check_branch
          %169 = sbr.rel (%p167) target = $region28
        $region27: #{tpu_custom_call.1} parent=19 // pred_region
          %s170 = sand.u32 %s18, 1
          %s171 = scalar_lea.sflag [#allocation6], %s170
          %s172 = sand.u32 %s54, 1
          %s173 = scalar_lea.vmem [#allocation5], %s172
          %s175 = ssub.s32 16, 16
          %176 = vsyncadd %s171, %s175
          %s177 = smul.addr %s18, 16
          %s178 = scalar_lea.hbm %s1, %s177
          %s180 = sshll.u32 %s173, 4
          %s181 = int_to_ptr.vmem [resolvable:$true] %s180
          %183 = dma.hbm_to_vmem [thread:$0]  %s178, 16, %s181, %s171
        $region28: #{tpu_custom_call.1} parent=19 // pred_fallthru
          _
      $region20: #{tpu_custom_call.1} parent=5 // pred_fallthru
        _
      %p184 = scmp.le.s32.totalorder 1, %s18
      %p185 = scmp.lt.s32.totalorder %s18, 3
      %p186 = pnand %p184, %p185
      %p187 = pneg %p186
      // Predicated region
      $region29: #{tpu_custom_call.1} parent=5 // pred_check
        _
      $region30: #{tpu_custom_call.1} parent=5 // pred_check_branch
        %189 = sbr.rel (%p186) target = $region32
      $region31: #{tpu_custom_call.1} parent=5 // pred_region
        %s190 = ssub.s32 %s18, 1
        %s191 = sand.u32 %s31, 1
        %s192 = scalar_lea.sflag [#allocation3], %s191
        %s193 = sand.u32 %s31, 1
        %s194 = smul.addr %s193, 4
        %s195 = scalar_lea.vmem [#allocation2], %s194
        // Predicated region
        $region33: #{tpu_custom_call.1} parent=31 // pred_check
          %p196 = pneg %p44
        $region34: #{tpu_custom_call.1} parent=31 // pred_check_branch
          %198 = sbr.rel (%p196) target = $region36
        $region35: #{tpu_custom_call.1} parent=31 // pred_region
          %199 = dma.done %s192, 64
        $region36: #{tpu_custom_call.1} parent=31 // pred_fallthru
          _
        %s200 = sand.u32 %s23, 1
        %s201 = scalar_lea.sflag [#allocation6], %s200
        %s202 = sand.u32 %s57, 1
        %s203 = scalar_lea.vmem [#allocation5], %s202
        // Predicated region
        $region37: #{tpu_custom_call.1} parent=31 // pred_check
          %p204 = pneg %p70
        $region38: #{tpu_custom_call.1} parent=31 // pred_check_branch
          %206 = sbr.rel (%p204) target = $region40
        $region39: #{tpu_custom_call.1} parent=31 // pred_region
          %207 = dma.done %s201, 16
        $region40: #{tpu_custom_call.1} parent=31 // pred_fallthru
          _
        // Predicated region
        $region41: #{tpu_custom_call.1} parent=31 // pred_check
          %p208 = pneg %p91
        $region42: #{tpu_custom_call.1} parent=31 // pred_check_branch
          %210 = sbr.rel (%p208) target = $region44
        $region43: #{tpu_custom_call.1} parent=31 // pred_region
          %211 = dma.done [#allocation6], 2048
        $region44: #{tpu_custom_call.1} parent=31 // pred_fallthru
          _
        %s212 = sand.u32 %s31, 1
        %s213 = scalar_lea.sflag [#allocation3], %s212
        %s214 = sand.u32 %s31, 1
        %s215 = smul.addr %s214, 4
        %s216 = scalar_lea.vmem [#allocation2], %s215
        %p217 = pneg %p44
        %p218 = pneg %p41
        %s219 = sand.u32 %s23, 1
        %s220 = scalar_lea.sflag [#allocation6], %s219
        %s221 = sand.u32 %s57, 1
        %s222 = scalar_lea.vmem [#allocation5], %s221
        %p223 = pneg %p70
        %p224 = pneg %p67
        %p225 = pneg %p91
        %p226 = pneg %p88
        %p227 = pneg %p117
        %p228 = pneg %p114
        %s229 = sand.u32 %s104, 1
        %s230 = scalar_lea.sflag [#allocation4], %s229
        %s231 = sand.u32 %s104, 1
        %s232 = smul.addr %s231, 4
        %s233 = scalar_lea.vmem [#allocation8], %s232
        %v234 = vld [vmem:[#allocation7] sm:$0xff]
        %v235 = vld [vmem:[#allocation7 + $0x8] sm:$0xff]
        %v236 = vld [vmem:[#allocation7 + $0x10] sm:$0xff]
        %v237 = vld [vmem:[#allocation7 + $0x18] sm:$0xff]
        %v238 = vld [vmem:[#allocation7 + $0x20] sm:$0xff]
        %v239 = vld [vmem:[#allocation7 + $0x28] sm:$0xff]
        %v240 = vld [vmem:[#allocation7 + $0x30] sm:$0xff]
        %v241 = vld [vmem:[#allocation7 + $0x38] sm:$0xff]
        %v242 = vld [vmem:[#allocation7 + $0x40] sm:$0xff]
        %v243 = vld [vmem:[#allocation7 + $0x48] sm:$0xff]
        %v244 = vld [vmem:[#allocation7 + $0x50] sm:$0xff]
        %v245 = vld [vmem:[#allocation7 + $0x58] sm:$0xff]
        %v246 = vld [vmem:[#allocation7 + $0x60] sm:$0xff]
        %v247 = vld [vmem:[#allocation7 + $0x68] sm:$0xff]
        %v248 = vld [vmem:[#allocation7 + $0x70] sm:$0xff]
        %v249 = vld [vmem:[#allocation7 + $0x78] sm:$0xff]
        %v250 = vld [vmem:[%s195] sm:$0xf]
        %v251 = vld [vmem:[%s203] sm:$0x1]
        %252 = vmatprep.subr.mxu0 0.0
        %253 = vmatpush1.msra.mxu0 %v249
        %254 = vmatprep.subr.mxu0 0.0
        %255 = vmatpush1.msra.mxu0 %v248
        %256 = vmatprep.subr.mxu0 0.0
        %257 = vmatpush1.msra.mxu0 %v247
        %258 = vmatprep.subr.mxu0 0.0
        %259 = vmatpush1.msra.mxu0 %v246
        %260 = vmatprep.subr.mxu0 0.0
        %261 = vmatpush1.msra.mxu0 %v245
        %262 = vmatprep.subr.mxu0 0.0
        %263 = vmatpush1.msra.mxu0 %v244
        %264 = vmatprep.subr.mxu0 0.0
        %265 = vmatpush1.msra.mxu0 %v243
        %266 = vmatprep.subr.mxu0 0.0
        %267 = vmatpush1.msra.mxu0 %v242
        %268 = vmatprep.subr.mxu0 0.0
        %269 = vmatpush1.msra.mxu0 %v241
        %270 = vmatprep.subr.mxu0 0.0
        %271 = vmatpush1.msra.mxu0 %v240
        %272 = vmatprep.subr.mxu0 0.0
        %273 = vmatpush1.msra.mxu0 %v239
        %274 = vmatprep.subr.mxu0 0.0
        %275 = vmatpush1.msra.mxu0 %v238
        %276 = vmatprep.subr.mxu0 0.0
        %277 = vmatpush1.msra.mxu0 %v237
        %278 = vmatprep.subr.mxu0 0.0
        %279 = vmatpush1.msra.mxu0 %v236
        %280 = vmatprep.subr.mxu0 0.0
        %281 = vmatpush1.msra.mxu0 %v235
        %282 = vmatprep.subr.mxu0 0.0
        %283 = vmatpush1.msra.mxu0 %v234
        %284 = vmatprep.subr.mxu0 0.0
        %285 = vmatpush2.msra.mxu0 0.0
        %286 = vmatprep.subr.mxu0 0.0
        %287 = vmatpush2.msra.mxu0 0.0
        %288 = vmatprep.subr.mxu0 0.0
        %289 = vmatpush2.msra.mxu0 0.0
        %290 = vmatprep.subr.mxu0 0.0
        %291 = vmatpush2.msra.mxu0 0.0
        %292 = vmatprep.subr.mxu0 0.0
        %293 = vmatpush2.msra.mxu0 0.0
        %294 = vmatprep.subr.mxu0 0.0
        %295 = vmatpush2.msra.mxu0 0.0
        %296 = vmatprep.subr.mxu0 0.0
        %297 = vmatpush2.msra.mxu0 0.0
        %298 = vmatprep.subr.mxu0 0.0
        %299 = vmatpush2.msra.mxu0 0.0
        %300 = vmatprep.subr.mxu0 0.0
        %301 = vmatpush2.msra.mxu0 0.0
        %302 = vmatprep.subr.mxu0 0.0
        %303 = vmatpush2.msra.mxu0 0.0
        %304 = vmatprep.subr.mxu0 0.0
        %305 = vmatpush2.msra.mxu0 0.0
        %306 = vmatprep.subr.mxu0 0.0
        %307 = vmatpush2.msra.mxu0 0.0
        %308 = vmatprep.subr.mxu0 0.0
        %309 = vmatpush2.msra.mxu0 0.0
        %310 = vmatprep.subr.mxu0 0.0
        %311 = vmatpush2.msra.mxu0 0.0
        %312 = vmatprep.subr.mxu0 0.0
        %313 = vmatpush2.msra.mxu0 0.0
        %314 = vmatprep.subr.mxu0 0.0
        %315 = vmatpush2.msra.mxu0 0.0
        %316 = vmatprep.mubr.f32.mxu0 0.0
        %317 = vmatmul.mubr.f32.gmra.mxu0 %v251
        %v318 = vpop.f32.mrf.mxu0
        %v319 = vadd.f32 1e-09, %v318
        %v320 = vpop.f32.mrf.mxu0
        %321 = vdwg.mxu0
        %v322 = vrcp.pop %v319
        %323 = vmatprep.subr.mxu0 0.0
        %324 = vmatpush1.msra.mxu0 %v249
        %325 = vmatprep.subr.mxu0 0.0
        %326 = vmatpush1.msra.mxu0 %v248
        %327 = vmatprep.subr.mxu0 0.0
        %328 = vmatpush1.msra.mxu0 %v247
        %329 = vmatprep.subr.mxu0 0.0
        %330 = vmatpush1.msra.mxu0 %v246
        %331 = vmatprep.subr.mxu0 0.0
        %332 = vmatpush1.msra.mxu0 %v245
        %333 = vmatprep.subr.mxu0 0.0
        %334 = vmatpush1.msra.mxu0 %v244
        %335 = vmatprep.subr.mxu0 0.0
        %336 = vmatpush1.msra.mxu0 %v243
        %337 = vmatprep.subr.mxu0 0.0
        %338 = vmatpush1.msra.mxu0 %v242
        %339 = vmatprep.subr.mxu0 0.0
        %340 = vmatpush1.msra.mxu0 %v241
        %341 = vmatprep.subr.mxu0 0.0
        %342 = vmatpush1.msra.mxu0 %v240
        %343 = vmatprep.subr.mxu0 0.0
        %344 = vmatpush1.msra.mxu0 %v239
        %345 = vmatprep.subr.mxu0 0.0
        %346 = vmatpush1.msra.mxu0 %v238
        %347 = vmatprep.subr.mxu0 0.0
        %348 = vmatpush1.msra.mxu0 %v237
        %349 = vmatprep.subr.mxu0 0.0
        %350 = vmatpush1.msra.mxu0 %v236
        %351 = vmatprep.subr.mxu0 0.0
        %352 = vmatpush1.msra.mxu0 %v235
        %353 = vmatprep.subr.mxu0 0.0
        %354 = vmatpush1.msra.mxu0 %v234
        %355 = vmatprep.subr.mxu0 0.0
        %356 = vmatpush2.msra.mxu0 0.0
        %357 = vmatprep.subr.mxu0 0.0
        %358 = vmatpush2.msra.mxu0 0.0
        %359 = vmatprep.subr.mxu0 0.0
        %360 = vmatpush2.msra.mxu0 0.0
        %361 = vmatprep.subr.mxu0 0.0
        %362 = vmatpush2.msra.mxu0 0.0
        %363 = vmatprep.subr.mxu0 0.0
        %364 = vmatpush2.msra.mxu0 0.0
        %365 = vmatprep.subr.mxu0 0.0
        %366 = vmatpush2.msra.mxu0 0.0
        %367 = vmatprep.subr.mxu0 0.0
        %368 = vmatpush2.msra.mxu0 0.0
        %369 = vmatprep.subr.mxu0 0.0
        %370 = vmatpush2.msra.mxu0 0.0
        %371 = vmatprep.subr.mxu0 0.0
        %372 = vmatpush2.msra.mxu0 0.0
        %373 = vmatprep.subr.mxu0 0.0
        %374 = vmatpush2.msra.mxu0 0.0
        %375 = vmatprep.subr.mxu0 0.0
        %376 = vmatpush2.msra.mxu0 0.0
        %377 = vmatprep.subr.mxu0 0.0
        %378 = vmatpush2.msra.mxu0 0.0
        %379 = vmatprep.subr.mxu0 0.0
        %380 = vmatpush2.msra.mxu0 0.0
        %381 = vmatprep.subr.mxu0 0.0
        %382 = vmatpush2.msra.mxu0 0.0
        %383 = vmatprep.subr.mxu0 0.0
        %384 = vmatpush2.msra.mxu0 0.0
        %385 = vmatprep.subr.mxu0 0.0
        %386 = vmatpush2.msra.mxu0 0.0
        %387 = vmatprep.mubr.f32.mxu0 0.0
        %388 = vmatmul.mubr.f32.gmra.mxu0 %v250
        %v389 = vpop.f32.mrf.mxu0
        %v390 = vadd.f32 0.0, %v389
        %v391 = vpop.f32.mrf.mxu0
        %392 = vdwg.mxu0
        %v393 = vlaneseq
        %v394 = vshrl.u32 %v393, 7
        %v395 = vsub.s32 0, %v394
        %v396 = vrot.slane %v322, %v395
        %v397 = vmul.f32 %v390, %v396
        %v399 = vlaneseq
        %v400 = vshrl.u32 %v399, 7
        %v401 = vsub.s32 0, %v400
        %v402 = vrot.slane %v251, %v401
        %v404 = vmul.f32 %v397, %v402
        %v405 = vsub.f32 %v250, %v404
        %v406 = vmul.f32 %v405, %v405
        %v407 = vmul.f32 %v406, %v402
        %408 = vmatprep.subr.mxu0 0.0
        %409 = vmatpush1.msra.mxu0 %v249
        %410 = vmatprep.subr.mxu0 0.0
        %411 = vmatpush1.msra.mxu0 %v248
        %412 = vmatprep.subr.mxu0 0.0
        %413 = vmatpush1.msra.mxu0 %v247
        %414 = vmatprep.subr.mxu0 0.0
        %415 = vmatpush1.msra.mxu0 %v246
        %416 = vmatprep.subr.mxu0 0.0
        %417 = vmatpush1.msra.mxu0 %v245
        %418 = vmatprep.subr.mxu0 0.0
        %419 = vmatpush1.msra.mxu0 %v244
        %420 = vmatprep.subr.mxu0 0.0
        %421 = vmatpush1.msra.mxu0 %v243
        %422 = vmatprep.subr.mxu0 0.0
        %423 = vmatpush1.msra.mxu0 %v242
        %424 = vmatprep.subr.mxu0 0.0
        %425 = vmatpush1.msra.mxu0 %v241
        %426 = vmatprep.subr.mxu0 0.0
        %427 = vmatpush1.msra.mxu0 %v240
        %428 = vmatprep.subr.mxu0 0.0
        %429 = vmatpush1.msra.mxu0 %v239
        %430 = vmatprep.subr.mxu0 0.0
        %431 = vmatpush1.msra.mxu0 %v238
        %432 = vmatprep.subr.mxu0 0.0
        %433 = vmatpush1.msra.mxu0 %v237
        %434 = vmatprep.subr.mxu0 0.0
        %435 = vmatpush1.msra.mxu0 %v236
        %436 = vmatprep.subr.mxu0 0.0
        %437 = vmatpush1.msra.mxu0 %v235
        %438 = vmatprep.subr.mxu0 0.0
        %439 = vmatpush1.msra.mxu0 %v234
        %440 = vmatprep.subr.mxu0 0.0
        %441 = vmatpush2.msra.mxu0 0.0
        %442 = vmatprep.subr.mxu0 0.0
        %443 = vmatpush2.msra.mxu0 0.0
        %444 = vmatprep.subr.mxu0 0.0
        %445 = vmatpush2.msra.mxu0 0.0
        %446 = vmatprep.subr.mxu0 0.0
        %447 = vmatpush2.msra.mxu0 0.0
        %448 = vmatprep.subr.mxu0 0.0
        %449 = vmatpush2.msra.mxu0 0.0
        %450 = vmatprep.subr.mxu0 0.0
        %451 = vmatpush2.msra.mxu0 0.0
        %452 = vmatprep.subr.mxu0 0.0
        %453 = vmatpush2.msra.mxu0 0.0
        %454 = vmatprep.subr.mxu0 0.0
        %455 = vmatpush2.msra.mxu0 0.0
        %456 = vmatprep.subr.mxu0 0.0
        %457 = vmatpush2.msra.mxu0 0.0
        %458 = vmatprep.subr.mxu0 0.0
        %459 = vmatpush2.msra.mxu0 0.0
        %460 = vmatprep.subr.mxu0 0.0
        %461 = vmatpush2.msra.mxu0 0.0
        %462 = vmatprep.subr.mxu0 0.0
        %463 = vmatpush2.msra.mxu0 0.0
        %464 = vmatprep.subr.mxu0 0.0
        %465 = vmatpush2.msra.mxu0 0.0
        %466 = vmatprep.subr.mxu0 0.0
        %467 = vmatpush2.msra.mxu0 0.0
        %468 = vmatprep.subr.mxu0 0.0
        %469 = vmatpush2.msra.mxu0 0.0
        %470 = vmatprep.subr.mxu0 0.0
        %471 = vmatpush2.msra.mxu0 0.0
        %472 = vmatprep.mubr.f32.mxu0 0.0
        %473 = vmatmul.mubr.f32.gmra.mxu0 %v407
        %v474 = vpop.f32.mrf.mxu0
        %v475 = vadd.f32 0.0, %v474
        %v476 = vpop.f32.mrf.mxu0
        %477 = vdwg.mxu0
        %v478 = vmul.f32 %v475, %v396
        %v479 = vmul.f32 %v478, %v402
        %v480 = vadd.f32 %v479, 1e-09
        %v481 = vrsqrt.pop %v480
        %v482 = vmul.f32 %v405, %v481
        %483 = vst [vmem:[%s233] sm:$0xf] %v482
        %s484 = sand.u32 %s104, 1
        %s485 = scalar_lea.sflag [#allocation4], %s484
        %s486 = sand.u32 %s104, 1
        %s487 = smul.addr %s486, 4
        %s488 = scalar_lea.vmem [#allocation8], %s487
        // Predicated region
        $region45: #{tpu_custom_call.1} parent=31 // pred_check
          %p489 = pneg %p114
        $region46: #{tpu_custom_call.1} parent=31 // pred_check_branch
          %491 = sbr.rel (%p489) target = $region48
        $region47: #{tpu_custom_call.1} parent=31 // pred_region
          %s493 = ssub.s32 64, 64
          %494 = vsyncadd %s485, %s493
          %s495 = smul.addr %s23, 64
          %s496 = scalar_lea.hbm %s3, %s495
          %s498 = sshll.u32 %s488, 4
          %s499 = int_to_ptr.vmem [resolvable:$true] %s498
          %501 = dma.vmem_to_hbm [thread:$0]  %s499, 64, %s496, %s485
        $region48: #{tpu_custom_call.1} parent=31 // pred_fallthru
          _
      $region32: #{tpu_custom_call.1} parent=5 // pred_fallthru
        _
      %p502 = scmp.le.s32.totalorder 2, %s18
      // Predicated region
      $region49: #{tpu_custom_call.1} parent=5 // pred_check
        %p503 = pneg %p502
      $region50: #{tpu_custom_call.1} parent=5 // pred_check_branch
        %505 = sbr.rel (%p503) target = $region52
      $region51: #{tpu_custom_call.1} parent=5 // pred_region
        %s506 = ssub.s32 %s18, 2
        // Predicated region
        $region53: #{tpu_custom_call.1} parent=51 // pred_check
          %p507 = pneg %p120
        $region54: #{tpu_custom_call.1} parent=51 // pred_check_branch
          %509 = sbr.rel (%p507) target = $region56
        $region55: #{tpu_custom_call.1} parent=51 // pred_region
          %s510 = sand.u32 %s105, 1
          %s511 = scalar_lea.sflag [#allocation4], %s510
          %s512 = sand.u32 %s105, 1
          %s513 = smul.addr %s512, 4
          %s514 = scalar_lea.vmem [#allocation8], %s513
          %515 = dma.done %s511, 64
        $region56: #{tpu_custom_call.1} parent=51 // pred_fallthru
          _
      $region52: #{tpu_custom_call.1} parent=5 // pred_fallthru
        _
    $region6: #{tpu_custom_call.1} parent=1 // loop_footer
      %s22 = sadd.s32 1, %s18
    $region7: #{tpu_custom_call.1} parent=1 // loop_footer_branch
      %17 = sbr.rel target = $region3
    $region8: #{tpu_custom_call.1} parent=1 // loop_exit
      _
    %516 = vsyncpa [#allocation3], 1
    %s517 = scalar_lea.sflag [#allocation3], 1
    %518 = vsyncpa %s517, 1
    %519 = vsyncpa [#allocation6], 1
    %s520 = scalar_lea.sflag [#allocation6], 1
    %521 = vsyncpa %s520, 1
    %522 = vsyncpa [#allocation4], 1
    %s523 = scalar_lea.sflag [#allocation4], 1
    %524 = vsyncpa %s523, 1

</llo_original>
